<compile_context>
chip_gen: v7x
topology: tpu7x:2x2x1
jax: 0.10.0
libtpu: 0.0.40
codegen_flags: <defaults>
</compile_context>

<pallas_src>
import functools
import math

import jax
import jax.numpy as jnp
import numpy as np
from jax import lax
from jax.experimental import pallas as pl
from jax.experimental.pallas import tpu as pltpu

_WAVELET = 0.7071067811865476  # 1/sqrt(2), matches the registered buffer


def _idwt_kernel(x_ref, o_ref, *, scale, rc):
    """x_ref / o_ref: (1, 8, rows_tile, L).

    Input axis 1 holds the 8 subbands s = 4*sT + 2*sH + sW; output axis 1
    holds the 8 parities p = 4*dT + 2*dH + dW with
        out[p] = scale * sum_s (-1)^popcount(p & s) * x[s]
    computed as a separable 3-stage butterfly on whole-vreg (rc, L) slabs.
    """
    rows_tile = x_ref.shape[2]
    n_chunks = rows_tile // rc  # exact by construction in the wrapper

    def chunk(c, carry):
        r0 = pl.multiple_of(c * rc, rc)
        rows = pl.ds(r0, rc)
        xs = [x_ref[0, s, rows].astype(jnp.float32) for s in range(8)]

        # T stage (subband bit 2): rows become 4*dT + 2*sH + sW.
        t = [xs[j] + xs[j + 4] for j in range(4)] + \
            [xs[j] - xs[j + 4] for j in range(4)]
        # H stage (subband bit 1): rows become 4*dT + 2*dH + sW.
        h = [t[0] + t[2], t[1] + t[3], t[0] - t[2], t[1] - t[3],
             t[4] + t[6], t[5] + t[7], t[4] - t[6], t[5] - t[7]]
        # W stage (subband bit 0) + scale; store each parity row immediately.
        for k in range(4):
            e, o = h[2 * k], h[2 * k + 1]
            o_ref[0, 2 * k, rows] = ((e + o) * scale).astype(o_ref.dtype)
            o_ref[0, 2 * k + 1, rows] = ((e - o) * scale).astype(o_ref.dtype)
        return carry

    lax.fori_loop(0, n_chunks, chunk, 0, unroll=True)


def _choose_lane(m, max_lane=512):
    """Largest divisor of m that is <= max_lane, preferring multiples of 128."""
    best = None
    for cand in range(min(m, max_lane), 0, -1):
        if m % cand == 0:
            if cand % 128 == 0:
                return cand
            if best is None:
                best = cand  # largest (possibly lane-sparse) fallback
    return best if best is not None else m


def _choose_rows_tile(r, lane, batch, target_cols=65536, max_rows=128,
                      min_steps=8):
    """Row tile: multiple of 8 (or full r), ~0.5-2 MiB blocks, >= min_steps grid."""
    if r <= 8:
        return r
    rt = min(r, max(8, target_cols // lane))
    rt = max(8, (rt // 8) * 8)
    rt = min(rt, max_rows)
    # Keep enough grid steps so multi-TC chips (v7x) shard the grid.
    tiles_wanted = -(-min_steps // max(1, batch))
    if -(-r // rt) < tiles_wanted:
        rows_per_tile = -(-r // tiles_wanted)          # ceil
        rows_per_tile = -(-rows_per_tile // 8) * 8     # round up to mult of 8
        rt = max(8, min(rt, rows_per_tile))
    return rt


def unpatcher_forward(x, rescale=True):
    """Pallas implementation of UnPatcher.forward.

    x: (B, 8*g, T, H, W)  ->  (B, g, 2T, 2H, 2W)
    """
    B, C, T, H, W = x.shape
    assert C % 8 == 0
    g = C // 8
    M = g * T * H * W

    L = _choose_lane(M)
    R = M // L
    rt = _choose_rows_tile(R, L, B)
    rc = min(8, rt)  # rt is either <= 8 (== R) or a multiple of 8

    # Free, contiguous reshape (channel axis is subband-major): no HBM pass.
    xr = x.reshape(B, 8, R, L)

    # Each of the 3 transposed convs multiplies by +-1/sqrt(2); optional rescale.
    scale = _WAVELET ** 3
    if rescale:
        scale = scale / (2.0 * math.sqrt(2.0))

    grid = (B, pl.cdiv(R, rt))

    out = pl.pallas_call(
        functools.partial(_idwt_kernel, scale=scale, rc=rc),
        out_shape=jax.ShapeDtypeStruct((B, 8, R, L), x.dtype),
        grid=grid,
        in_specs=[pl.BlockSpec((1, 8, rt, L), lambda b, r: (b, 0, r, 0))],
        out_specs=pl.BlockSpec((1, 8, rt, L), lambda b, r: (b, 0, r, 0)),
        compiler_params=pltpu.CompilerParams(
            dimension_semantics=("parallel", "parallel"),
            vmem_limit_bytes=32 * 1024 * 1024,
        ),
    )(xr)

    # Epilogue: interleave the 8 parity rows into the upsampled volume.
    # TODO(synk): fuse this stride-2 interleave into the kernel output (or let
    # consumers accept the parity-major layout) to halve end-to-end HBM traffic.
    y = out.reshape(B, 2, 2, 2, g, T, H, W)          # (B, dt, dh, dw, g, T, H, W)
    y = jnp.transpose(y, (0, 4, 5, 1, 6, 2, 7, 3))   # (B, g, T, dt, H, dh, W, dw)
    return y.reshape(B, g, 2 * T, 2 * H, 2 * W)


def unpatcher_ref(x, rescale=True):
    """Pure-JAX reference mirroring the PyTorch conv_transpose3d chain."""
    dtype = x.dtype
    h = jnp.array([_WAVELET, _WAVELET], dtype=dtype)
    hl = h[::-1]
    hh = h * jnp.array([1.0, -1.0], dtype=dtype)

    def up(z, k, axis):
        # conv_transpose with kernel size 2, stride 2 along `axis`:
        # out[..., 2i + d] = z[..., i] * k[d]
        z = jnp.moveaxis(z, axis, -1)
        o = z[..., None] * k
        o = o.reshape(*z.shape[:-1], z.shape[-1] * 2)
        return jnp.moveaxis(o, -1, axis)

    xlll, xllh, xlhl, xlhh, xhll, xhlh, xhhl, xhhh = jnp.split(x, 8, axis=1)
    xll = up(xlll, hl, -1) + up(xllh, hh, -1)
    xlh = up(xlhl, hl, -1) + up(xlhh, hh, -1)
    xhl = up(xhll, hl, -1) + up(xhlh, hh, -1)
    xhh = up(xhhl, hl, -1) + up(xhhh, hh, -1)
    xl = up(xll, hl, -2) + up(xlh, hh, -2)
    xh = up(xhl, hl, -2) + up(xhh, hh, -2)
    out = up(xl, hl, -3) + up(xh, hh, -3)
    if rescale:
        out = out / (2.0 * jnp.sqrt(jnp.array(2.0, dtype)))
    return out


if __name__ == "__main__":
    key = jax.random.PRNGKey(0)
    B, g, T, H, W = 2, 2, 4, 8, 8          # input channels = 8*g = 16
    x = jax.random.normal(key, (B, 8 * g, T, H, W), dtype=jnp.float32)

    y = unpatcher_forward(x, rescale=True)
    jax.block_until_ready(y)
    assert y.shape == (B, g, 2 * T, 2 * H, 2 * W)

    y_ref = unpatcher_ref(x, rescale=True)
    np.testing.assert_allclose(np.asarray(y), np.asarray(y_ref), rtol=1e-5, atol=1e-5)

    print("KERNEL_OK")
</pallas_src>

<mosaic_0001>
module attributes {stable_mosaic.version = 11 : i64} {
  func.func @_idwt_kernel(%arg0: i32, %arg1: i32, %arg2: memref<1x8x1x512xf32, #tpu.memory_space<vmem>>, %arg3: memref<1x8x1x512xf32, #tpu.memory_space<vmem>>) attributes {dimension_semantics = [#tpu.dimension_semantics<parallel>, #tpu.dimension_semantics<parallel>], iteration_bounds = array<i64: 2, 1>, scalar_prefetch = 0 : i64, scratch_operands = 0 : i64, tpu.core_type = #tpu.core_type<tc>, window_params = [{transform_indices = @transform_0, window_bounds = array<i64: 1, 8, 1, 512>}, {transform_indices = @transform_1, window_bounds = array<i64: 1, 8, 1, 512>}]} {
    %c0_i32 = arith.constant 0 : i32
    %c1_i32 = arith.constant 1 : i32
    %0 = arith.muli %c0_i32, %c1_i32 : i32
    %1 = tpu.assume_multiple %0, 1 : i32
    %c0 = arith.constant 0 : index
    %c0_0 = arith.constant 0 : index
    %2 = arith.index_cast %1 : i32 to index
    %c0_1 = arith.constant 0 : index
    %3 = vector.load %arg2[%c0, %c0_0, %2, %c0_1] : memref<1x8x1x512xf32, #tpu.memory_space<vmem>>, vector<1x1x1x512xf32>
    %4 = vector.shape_cast %3 : vector<1x1x1x512xf32> to vector<1x512xf32>
    %c0_2 = arith.constant 0 : index
    %c1 = arith.constant 1 : index
    %5 = arith.index_cast %1 : i32 to index
    %c0_3 = arith.constant 0 : index
    %6 = vector.load %arg2[%c0_2, %c1, %5, %c0_3] : memref<1x8x1x512xf32, #tpu.memory_space<vmem>>, vector<1x1x1x512xf32>
    %7 = vector.shape_cast %6 : vector<1x1x1x512xf32> to vector<1x512xf32>
    %c0_4 = arith.constant 0 : index
    %c2 = arith.constant 2 : index
    %8 = arith.index_cast %1 : i32 to index
    %c0_5 = arith.constant 0 : index
    %9 = vector.load %arg2[%c0_4, %c2, %8, %c0_5] : memref<1x8x1x512xf32, #tpu.memory_space<vmem>>, vector<1x1x1x512xf32>
    %10 = vector.shape_cast %9 : vector<1x1x1x512xf32> to vector<1x512xf32>
    %c0_6 = arith.constant 0 : index
    %c3 = arith.constant 3 : index
    %11 = arith.index_cast %1 : i32 to index
    %c0_7 = arith.constant 0 : index
    %12 = vector.load %arg2[%c0_6, %c3, %11, %c0_7] : memref<1x8x1x512xf32, #tpu.memory_space<vmem>>, vector<1x1x1x512xf32>
    %13 = vector.shape_cast %12 : vector<1x1x1x512xf32> to vector<1x512xf32>
    %c0_8 = arith.constant 0 : index
    %c4 = arith.constant 4 : index
    %14 = arith.index_cast %1 : i32 to index
    %c0_9 = arith.constant 0 : index
    %15 = vector.load %arg2[%c0_8, %c4, %14, %c0_9] : memref<1x8x1x512xf32, #tpu.memory_space<vmem>>, vector<1x1x1x512xf32>
    %16 = vector.shape_cast %15 : vector<1x1x1x512xf32> to vector<1x512xf32>
    %c0_10 = arith.constant 0 : index
    %c5 = arith.constant 5 : index
    %17 = arith.index_cast %1 : i32 to index
    %c0_11 = arith.constant 0 : index
    %18 = vector.load %arg2[%c0_10, %c5, %17, %c0_11] : memref<1x8x1x512xf32, #tpu.memory_space<vmem>>, vector<1x1x1x512xf32>
    %19 = vector.shape_cast %18 : vector<1x1x1x512xf32> to vector<1x512xf32>
    %c0_12 = arith.constant 0 : index
    %c6 = arith.constant 6 : index
    %20 = arith.index_cast %1 : i32 to index
    %c0_13 = arith.constant 0 : index
    %21 = vector.load %arg2[%c0_12, %c6, %20, %c0_13] : memref<1x8x1x512xf32, #tpu.memory_space<vmem>>, vector<1x1x1x512xf32>
    %22 = vector.shape_cast %21 : vector<1x1x1x512xf32> to vector<1x512xf32>
    %c0_14 = arith.constant 0 : index
    %c7 = arith.constant 7 : index
    %23 = arith.index_cast %1 : i32 to index
    %c0_15 = arith.constant 0 : index
    %24 = vector.load %arg2[%c0_14, %c7, %23, %c0_15] : memref<1x8x1x512xf32, #tpu.memory_space<vmem>>, vector<1x1x1x512xf32>
    %25 = vector.shape_cast %24 : vector<1x1x1x512xf32> to vector<1x512xf32>
    %26 = arith.addf %4, %16 : vector<1x512xf32>
    %27 = arith.addf %7, %19 : vector<1x512xf32>
    %28 = arith.addf %10, %22 : vector<1x512xf32>
    %29 = arith.addf %13, %25 : vector<1x512xf32>
    %30 = arith.subf %4, %16 : vector<1x512xf32>
    %31 = arith.subf %7, %19 : vector<1x512xf32>
    %32 = arith.subf %10, %22 : vector<1x512xf32>
    %33 = arith.subf %13, %25 : vector<1x512xf32>
    %34 = arith.addf %26, %28 : vector<1x512xf32>
    %35 = arith.addf %27, %29 : vector<1x512xf32>
    %36 = arith.subf %26, %28 : vector<1x512xf32>
    %37 = arith.subf %27, %29 : vector<1x512xf32>
    %38 = arith.addf %30, %32 : vector<1x512xf32>
    %39 = arith.addf %31, %33 : vector<1x512xf32>
    %40 = arith.subf %30, %32 : vector<1x512xf32>
    %41 = arith.subf %31, %33 : vector<1x512xf32>
    %42 = arith.addf %34, %35 : vector<1x512xf32>
    %cst = arith.constant 1.250000e-01 : f32
    %43 = vector.broadcast %cst : f32 to vector<1x512xf32>
    %44 = arith.mulf %42, %43 : vector<1x512xf32>
    %c0_16 = arith.constant 0 : index
    %c0_17 = arith.constant 0 : index
    %45 = arith.index_cast %1 : i32 to index
    %c0_18 = arith.constant 0 : index
    %46 = vector.load %arg3[%c0_16, %c0_17, %45, %c0_18] : memref<1x8x1x512xf32, #tpu.memory_space<vmem>>, vector<1x1x1x512xf32>
    %47 = vector.shape_cast %46 : vector<1x1x1x512xf32> to vector<1x512xf32>
    %48 = vector.shape_cast %44 : vector<1x512xf32> to vector<1x1x1x512xf32>
    tpu.vector_store %arg3[%c0_16, %c0_17, %45, %c0_18], %48 {strides = array<i32>} : memref<1x8x1x512xf32, #tpu.memory_space<vmem>>, vector<1x1x1x512xf32>,
    %49 = arith.subf %34, %35 : vector<1x512xf32>
    %cst_19 = arith.constant 1.250000e-01 : f32
    %50 = vector.broadcast %cst_19 : f32 to vector<1x512xf32>
    %51 = arith.mulf %49, %50 : vector<1x512xf32>
    %c0_20 = arith.constant 0 : index
    %c1_21 = arith.constant 1 : index
    %52 = arith.index_cast %1 : i32 to index
    %c0_22 = arith.constant 0 : index
    %53 = vector.load %arg3[%c0_20, %c1_21, %52, %c0_22] : memref<1x8x1x512xf32, #tpu.memory_space<vmem>>, vector<1x1x1x512xf32>
    %54 = vector.shape_cast %53 : vector<1x1x1x512xf32> to vector<1x512xf32>
    %55 = vector.shape_cast %51 : vector<1x512xf32> to vector<1x1x1x512xf32>
    tpu.vector_store %arg3[%c0_20, %c1_21, %52, %c0_22], %55 {strides = array<i32>} : memref<1x8x1x512xf32, #tpu.memory_space<vmem>>, vector<1x1x1x512xf32>,
    %56 = arith.addf %36, %37 : vector<1x512xf32>
    %cst_23 = arith.constant 1.250000e-01 : f32
    %57 = vector.broadcast %cst_23 : f32 to vector<1x512xf32>
    %58 = arith.mulf %56, %57 : vector<1x512xf32>
    %c0_24 = arith.constant 0 : index
    %c2_25 = arith.constant 2 : index
    %59 = arith.index_cast %1 : i32 to index
    %c0_26 = arith.constant 0 : index
    %60 = vector.load %arg3[%c0_24, %c2_25, %59, %c0_26] : memref<1x8x1x512xf32, #tpu.memory_space<vmem>>, vector<1x1x1x512xf32>
    %61 = vector.shape_cast %60 : vector<1x1x1x512xf32> to vector<1x512xf32>
    %62 = vector.shape_cast %58 : vector<1x512xf32> to vector<1x1x1x512xf32>
    tpu.vector_store %arg3[%c0_24, %c2_25, %59, %c0_26], %62 {strides = array<i32>} : memref<1x8x1x512xf32, #tpu.memory_space<vmem>>, vector<1x1x1x512xf32>,
    %63 = arith.subf %36, %37 : vector<1x512xf32>
    %cst_27 = arith.constant 1.250000e-01 : f32
    %64 = vector.broadcast %cst_27 : f32 to vector<1x512xf32>
    %65 = arith.mulf %63, %64 : vector<1x512xf32>
    %c0_28 = arith.constant 0 : index
    %c3_29 = arith.constant 3 : index
    %66 = arith.index_cast %1 : i32 to index
    %c0_30 = arith.constant 0 : index
    %67 = vector.load %arg3[%c0_28, %c3_29, %66, %c0_30] : memref<1x8x1x512xf32, #tpu.memory_space<vmem>>, vector<1x1x1x512xf32>
    %68 = vector.shape_cast %67 : vector<1x1x1x512xf32> to vector<1x512xf32>
    %69 = vector.shape_cast %65 : vector<1x512xf32> to vector<1x1x1x512xf32>
    tpu.vector_store %arg3[%c0_28, %c3_29, %66, %c0_30], %69 {strides = array<i32>} : memref<1x8x1x512xf32, #tpu.memory_space<vmem>>, vector<1x1x1x512xf32>,
    %70 = arith.addf %38, %39 : vector<1x512xf32>
    %cst_31 = arith.constant 1.250000e-01 : f32
    %71 = vector.broadcast %cst_31 : f32 to vector<1x512xf32>
    %72 = arith.mulf %70, %71 : vector<1x512xf32>
    %c0_32 = arith.constant 0 : index
    %c4_33 = arith.constant 4 : index
    %73 = arith.index_cast %1 : i32 to index
    %c0_34 = arith.constant 0 : index
    %74 = vector.load %arg3[%c0_32, %c4_33, %73, %c0_34] : memref<1x8x1x512xf32, #tpu.memory_space<vmem>>, vector<1x1x1x512xf32>
    %75 = vector.shape_cast %74 : vector<1x1x1x512xf32> to vector<1x512xf32>
    %76 = vector.shape_cast %72 : vector<1x512xf32> to vector<1x1x1x512xf32>
    tpu.vector_store %arg3[%c0_32, %c4_33, %73, %c0_34], %76 {strides = array<i32>} : memref<1x8x1x512xf32, #tpu.memory_space<vmem>>, vector<1x1x1x512xf32>,
    %77 = arith.subf %38, %39 : vector<1x512xf32>
    %cst_35 = arith.constant 1.250000e-01 : f32
    %78 = vector.broadcast %cst_35 : f32 to vector<1x512xf32>
    %79 = arith.mulf %77, %78 : vector<1x512xf32>
    %c0_36 = arith.constant 0 : index
    %c5_37 = arith.constant 5 : index
    %80 = arith.index_cast %1 : i32 to index
    %c0_38 = arith.constant 0 : index
    %81 = vector.load %arg3[%c0_36, %c5_37, %80, %c0_38] : memref<1x8x1x512xf32, #tpu.memory_space<vmem>>, vector<1x1x1x512xf32>
    %82 = vector.shape_cast %81 : vector<1x1x1x512xf32> to vector<1x512xf32>
    %83 = vector.shape_cast %79 : vector<1x512xf32> to vector<1x1x1x512xf32>
    tpu.vector_store %arg3[%c0_36, %c5_37, %80, %c0_38], %83 {strides = array<i32>} : memref<1x8x1x512xf32, #tpu.memory_space<vmem>>, vector<1x1x1x512xf32>,
    %84 = arith.addf %40, %41 : vector<1x512xf32>
    %cst_39 = arith.constant 1.250000e-01 : f32
    %85 = vector.broadcast %cst_39 : f32 to vector<1x512xf32>
    %86 = arith.mulf %84, %85 : vector<1x512xf32>
    %c0_40 = arith.constant 0 : index
    %c6_41 = arith.constant 6 : index
    %87 = arith.index_cast %1 : i32 to index
    %c0_42 = arith.constant 0 : index
    %88 = vector.load %arg3[%c0_40, %c6_41, %87, %c0_42] : memref<1x8x1x512xf32, #tpu.memory_space<vmem>>, vector<1x1x1x512xf32>
    %89 = vector.shape_cast %88 : vector<1x1x1x512xf32> to vector<1x512xf32>
    %90 = vector.shape_cast %86 : vector<1x512xf32> to vector<1x1x1x512xf32>
    tpu.vector_store %arg3[%c0_40, %c6_41, %87, %c0_42], %90 {strides = array<i32>} : memref<1x8x1x512xf32, #tpu.memory_space<vmem>>, vector<1x1x1x512xf32>,
    %91 = arith.subf %40, %41 : vector<1x512xf32>
    %cst_43 = arith.constant 1.250000e-01 : f32
    %92 = vector.broadcast %cst_43 : f32 to vector<1x512xf32>
    %93 = arith.mulf %91, %92 : vector<1x512xf32>
    %c0_44 = arith.constant 0 : index
    %c7_45 = arith.constant 7 : index
    %94 = arith.index_cast %1 : i32 to index
    %c0_46 = arith.constant 0 : index
    %95 = vector.load %arg3[%c0_44, %c7_45, %94, %c0_46] : memref<1x8x1x512xf32, #tpu.memory_space<vmem>>, vector<1x1x1x512xf32>
    %96 = vector.shape_cast %95 : vector<1x1x1x512xf32> to vector<1x512xf32>
    %97 = vector.shape_cast %93 : vector<1x512xf32> to vector<1x1x1x512xf32>
    tpu.vector_store %arg3[%c0_44, %c7_45, %94, %c0_46], %97 {strides = array<i32>} : memref<1x8x1x512xf32, #tpu.memory_space<vmem>>, vector<1x1x1x512xf32>,
    %c1_i32_47 = arith.constant 1 : i32
    return
  }
  func.func @transform_0(%arg0: i32, %arg1: i32) -> (i32, i32, i32, i32) {
    %c0_i32 = arith.constant 0 : i32
    %c0_i32_0 = arith.constant 0 : i32
    %c0_i32_1 = arith.constant 0 : i32
    return %arg0, %c0_i32, %arg1, %c0_i32_0 : i32, i32, i32, i32
  }
  func.func @transform_1(%arg0: i32, %arg1: i32) -> (i32, i32, i32, i32) {
    %c0_i32 = arith.constant 0 : i32
    %c0_i32_0 = arith.constant 0 : i32
    %c0_i32_1 = arith.constant 0 : i32
    return %arg0, %c0_i32, %arg1, %c0_i32_0 : i32, i32, i32, i32
  }
}

</mosaic_0001>

<llo_original>
// kernel: tpu_custom_call.1
$region0: #{tpu_custom_call.1}
  #allocation0 [shape = 'u32[]', space=smem, size = 0x4, offset = 0x4, fixed_abs, tag = 'smem constant byte address 0x4 - core index']
  #allocation1 [shape = 'u32[144,128]{1,0:T(1,128)}', space=vmem, size = 0x12000, scoped, tag = 'internal scratch']
  %s0 = inlined_call_operand.hbm [shape: f32[2,8,1,512], index: 0, kind: input, shape index: {}]
  %s1 = inlined_call_operand.hbm [shape: f32[2,8,1,512], index: 1, kind: output, shape index: {}]
  %s2 = sld [smem:[#allocation0]]
  $region41: #{tpu_custom_call.1} parent=0
    _
  %s4 = ssub.s32 1, %s2
  %s5 = scalar_select 0, %s4, %s2
  $region1: #{tpu_custom_call.1} parent=0
    #allocation2 [shape = 'u8[32768]{0}', space=vmem, size = 0x8000, scoped, tag = 'input window, operand 0']
    #allocation3 [shape = 's32[2]{0}', space=sflag, size = 0x8, scoped, tag = 'scoped memory for tpu_custom_call.1']
    #allocation4 [shape = 's32[2]{0}', space=sflag, size = 0x8, scoped, tag = 'scoped memory for tpu_custom_call.1']
    #allocation5 [shape = 'u8[32768]{0}', space=vmem, size = 0x8000, scoped, tag = 'output window, operand 0']
    %6 = vsyncpa [#allocation3], 0
    %s7 = scalar_lea.sflag [#allocation3], 1
    %8 = vsyncpa %s7, 0
    %9 = vsyncpa [#allocation4], 0
    %s10 = scalar_lea.sflag [#allocation4], 1
    %11 = vsyncpa %s10, 0
    loop: start=0, step=1, limit=4
    $region2: #{tpu_custom_call.1} parent=1 // loop_pre_header
      _
    $region3: #{tpu_custom_call.1} parent=1 // loop_header
      %s13 = sphi 0, %s17
      %p14 = scmp.ge.s32.totalorder %s13, 4
      %s20 = sphi 0, %s32
      %s21 = sphi 0, %s28
      %s22 = sphi 0, %s20
      %s23 = sphi 0, %s21
      %s24 = sphi 0, %s22
      %s25 = sphi 0, %s23
      %s37 = sphi 0, %s39
      %s40 = sphi 0, %s37
      %s41 = sphi 0, %s40
      %s57 = sphi 0, %s41
      %s65 = sphi 0, %s67
      %s68 = sphi 0, %s65
      %s69 = sphi 0, %s68
      %s85 = sphi 0, %s69
    $region4: #{tpu_custom_call.1} parent=1 // loop_header_branch
      %16 = sbr.rel (%p14) target = $region8
    $region5: #{tpu_custom_call.1} parent=1 // loop_body
      %s18 = ssub.s32 %s13, 1
      %s19 = ssub.s32 %s13, 2
      %s26 = sadd.s32 1, %s21
      %p27 = scmp.ge.s32.totalorder %s26, 1
      %s28 = scalar_select %p27, 0, %s26
      %s29 = sadd.s32 1, %s20
      %s30 = scalar_select %p27, %s29, %s20
      %p31 = scmp.ge.s32.totalorder %s30, 2
      %s32 = scalar_select %p31, 0, %s30
      %s33 = ssub.s32 %s20, %s32
      %s34 = ssub.s32 %s21, %s28
      %s35 = sor.u32 %s33, %s34
      %p36 = scmp.eq.s32.totalorder %s35, 0
      %s38 = sadd.s32 %s37, 1
      %s39 = scalar_select %p36, %s37, %s38
      %p42 = pneg %p36
      %p43 = scmp.eq.s32.totalorder %s13, 1
      %p44 = por %p42, %p43
      %p45 = scmp.ne.s32.totalorder %s37, %s40
      %p46 = scmp.eq.s32.totalorder %s13, 0
      %p47 = por %p45, %p46
      %p48 = scmp.ne.s32.totalorder %s37, %s40
      %p49 = scmp.eq.s32.totalorder %s18, 1
      %p50 = por %p48, %p49
      %p51 = scmp.ne.s32.totalorder %s40, %s41
      %p52 = scmp.eq.s32.totalorder %s18, 0
      %p53 = por %p51, %p52
      %p54 = scmp.ne.s32.totalorder %s40, %s41
      %p55 = scmp.eq.s32.totalorder %s19, 1
      %p56 = por %p54, %p55
      %p58 = scmp.ne.s32.totalorder %s41, %s57
      %p59 = scmp.eq.s32.totalorder %s19, 0
      %p60 = por %p58, %p59
      %s61 = ssub.s32 %s20, %s32
      %s62 = ssub.s32 %s21, %s28
      %s63 = sor.u32 %s61, %s62
      %p64 = scmp.eq.s32.totalorder %s63, 0
      %s66 = sadd.s32 %s65, 1
      %s67 = scalar_select %p64, %s65, %s66
      %p70 = pneg %p64
      %p71 = scmp.eq.s32.totalorder %s13, 1
      %p72 = por %p70, %p71
      %p73 = scmp.ne.s32.totalorder %s65, %s68
      %p74 = scmp.eq.s32.totalorder %s13, 0
      %p75 = por %p73, %p74
      %p76 = scmp.ne.s32.totalorder %s65, %s68
      %p77 = scmp.eq.s32.totalorder %s18, 1
      %p78 = por %p76, %p77
      %p79 = scmp.ne.s32.totalorder %s68, %s69
      %p80 = scmp.eq.s32.totalorder %s18, 0
      %p81 = por %p79, %p80
      %p82 = scmp.ne.s32.totalorder %s68, %s69
      %p83 = scmp.eq.s32.totalorder %s19, 1
      %p84 = por %p82, %p83
      %p86 = scmp.ne.s32.totalorder %s69, %s85
      %p87 = scmp.eq.s32.totalorder %s19, 0
      %p88 = por %p86, %p87
      %p89 = scmp.le.s32.totalorder 1, %s13
      %p90 = scmp.lt.s32.totalorder %s13, 3
      %p91 = pnand %p89, %p90
      %p92 = pneg %p91
      // Predicated region
      $region9: #{tpu_custom_call.1} parent=5 // pred_check
        _
      $region10: #{tpu_custom_call.1} parent=5 // pred_check_branch
        %94 = sbr.rel (%p91) target = $region12
      $region11: #{tpu_custom_call.1} parent=5 // pred_region
        %s95 = ssub.s32 %s13, 1
      $region12: #{tpu_custom_call.1} parent=5 // pred_fallthru
        _
      %p96 = scmp.lt.s32.totalorder %s13, 2
      // Predicated region
      $region13: #{tpu_custom_call.1} parent=5 // pred_check
        %p97 = pneg %p96
      $region14: #{tpu_custom_call.1} parent=5 // pred_check_branch
        %99 = sbr.rel (%p97) target = $region16
      $region15: #{tpu_custom_call.1} parent=5 // pred_region
        // Predicated region
        $region17: #{tpu_custom_call.1} parent=15 // pred_check
          %p100 = pneg %p47
        $region18: #{tpu_custom_call.1} parent=15 // pred_check_branch
          %102 = sbr.rel (%p100) target = $region20
        $region19: #{tpu_custom_call.1} parent=15 // pred_region
          %s103 = sand.u32 %s37, 1
          %s104 = scalar_lea.sflag [#allocation3], %s103
          %s105 = sand.u32 %s37, 1
          %s106 = smul.addr %s105, 32
          %s107 = scalar_lea.vmem [#allocation2], %s106
          %s109 = ssub.s32 512, 512
          %110 = vsyncadd %s104, %s109
          %s111 = smul.addr %s21, 4
          %s112 = smul.addr %s20, 32
          %s113 = sadd.s32 %s111, %s112
          %s114 = smul.addr %s113, 16
          %s115 = scalar_lea.hbm %s0, %s114
          %s116 = sshll.u32 %s107, 4
          %s117 = int_to_ptr.vmem [resolvable:$true] %s116
          %122 = dma.hbm_to_vmem [thread:$0]  %s115, 512, %s117, %s104, 64, 64, 4
        $region20: #{tpu_custom_call.1} parent=15 // pred_fallthru
          _
      $region16: #{tpu_custom_call.1} parent=5 // pred_fallthru
        _
      %p123 = scmp.le.s32.totalorder 1, %s13
      %p124 = scmp.lt.s32.totalorder %s13, 3
      %p125 = pnand %p123, %p124
      %p126 = pneg %p125
      // Predicated region
      $region21: #{tpu_custom_call.1} parent=5 // pred_check
        _
      $region22: #{tpu_custom_call.1} parent=5 // pred_check_branch
        %128 = sbr.rel (%p125) target = $region24
      $region23: #{tpu_custom_call.1} parent=5 // pred_region
        %s129 = ssub.s32 %s13, 1
        %s130 = sand.u32 %s40, 1
        %s131 = scalar_lea.sflag [#allocation3], %s130
        %s132 = sand.u32 %s40, 1
        %s133 = smul.addr %s132, 32
        %s134 = scalar_lea.vmem [#allocation2], %s133
        // Predicated region
        $region25: #{tpu_custom_call.1} parent=23 // pred_check
          %p135 = pneg %p53
        $region26: #{tpu_custom_call.1} parent=23 // pred_check_branch
          %137 = sbr.rel (%p135) target = $region28
        $region27: #{tpu_custom_call.1} parent=23 // pred_region
          %138 = dma.done %s131, 512
        $region28: #{tpu_custom_call.1} parent=23 // pred_fallthru
          _
        %s139 = sand.u32 %s40, 1
        %s140 = scalar_lea.sflag [#allocation3], %s139
        %s141 = sand.u32 %s40, 1
        %s142 = smul.addr %s141, 32
        %s143 = scalar_lea.vmem [#allocation2], %s142
        %p144 = pneg %p53
        %p145 = pneg %p50
        %p146 = pneg %p81
        %p147 = pneg %p78
        %s148 = sand.u32 %s68, 1
        %s149 = scalar_lea.sflag [#allocation4], %s148
        %s150 = sand.u32 %s68, 1
        %s151 = smul.addr %s150, 32
        %s152 = scalar_lea.vmem [#allocation5], %s151
        %s153 = smul.u32 0, 4
        %s154 = scalar_lea.vmem %s134, %s153 [#allocation2]
        %v155 = vld [vmem:[%s154] sm:$0xf]
        %s156 = sadd.s32 %s153, 4
        %s157 = scalar_lea.vmem %s134, %s156 [#allocation2]
        %v158 = vld [vmem:[%s157] sm:$0xf]
        %s159 = sadd.s32 %s153, 8
        %s160 = scalar_lea.vmem %s134, %s159 [#allocation2]
        %v161 = vld [vmem:[%s160] sm:$0xf]
        %s162 = sadd.s32 %s153, 12
        %s163 = scalar_lea.vmem %s134, %s162 [#allocation2]
        %v164 = vld [vmem:[%s163] sm:$0xf]
        %s165 = sadd.s32 %s153, 16
        %s166 = scalar_lea.vmem %s134, %s165 [#allocation2]
        %v167 = vld [vmem:[%s166] sm:$0xf]
        %s168 = sadd.s32 %s153, 20
        %s169 = scalar_lea.vmem %s134, %s168 [#allocation2]
        %v170 = vld [vmem:[%s169] sm:$0xf]
        %s171 = sadd.s32 %s153, 24
        %s172 = scalar_lea.vmem %s134, %s171 [#allocation2]
        %v173 = vld [vmem:[%s172] sm:$0xf]
        %s174 = sadd.s32 %s153, 28
        %s175 = scalar_lea.vmem %s134, %s174 [#allocation2]
        %v176 = vld [vmem:[%s175] sm:$0xf]
        %v177 = vadd.f32 %v155, %v167
        %v178 = vadd.f32 %v158, %v170
        %v179 = vadd.f32 %v161, %v173
        %v180 = vadd.f32 %v164, %v176
        %v181 = vsub.f32 %v155, %v167
        %v182 = vsub.f32 %v158, %v170
        %v183 = vsub.f32 %v161, %v173
        %v184 = vsub.f32 %v164, %v176
        %v185 = vadd.f32 %v177, %v179
        %v186 = vadd.f32 %v178, %v180
        %v187 = vsub.f32 %v177, %v179
        %v188 = vsub.f32 %v178, %v180
        %v189 = vadd.f32 %v181, %v183
        %v190 = vadd.f32 %v182, %v184
        %v191 = vsub.f32 %v181, %v183
        %v192 = vsub.f32 %v182, %v184
        %v193 = vadd.f32 %v185, %v186
        %v194 = vmul.f32 %v193, 0.125
        %s195 = scalar_lea.vmem %s152, %s153 [#allocation5]
        %v196 = vlaneseq
        %vm197 = vcmp.ge.s32.totalorder %v196, 0
        %vm198 = vcmp.lt.s32.totalorder %v196, 512
        %vm199 = vmand %vm197, %vm198
        %200 = vst.msk [vmem:[%s195] sm:$0xf] %vm199, %v194
        %v201 = vsub.f32 %v185, %v186
        %v202 = vmul.f32 %v201, 0.125
        %s203 = scalar_lea.vmem %s152, %s156 [#allocation5]
        %204 = vst.msk [vmem:[%s203] sm:$0xf] %vm199, %v202
        %v205 = vadd.f32 %v187, %v188
        %v206 = vmul.f32 %v205, 0.125
        %s207 = scalar_lea.vmem %s152, %s159 [#allocation5]
        %208 = vst.msk [vmem:[%s207] sm:$0xf] %vm199, %v206
        %v209 = vsub.f32 %v187, %v188
        %v210 = vmul.f32 %v209, 0.125
        %s211 = scalar_lea.vmem %s152, %s162 [#allocation5]
        %212 = vst.msk [vmem:[%s211] sm:$0xf] %vm199, %v210
        %v213 = vadd.f32 %v189, %v190
        %v214 = vmul.f32 %v213, 0.125
        %s215 = scalar_lea.vmem %s152, %s165 [#allocation5]
        %216 = vst.msk [vmem:[%s215] sm:$0xf] %vm199, %v214
        %v217 = vsub.f32 %v189, %v190
        %v218 = vmul.f32 %v217, 0.125
        %s219 = scalar_lea.vmem %s152, %s168 [#allocation5]
        %220 = vst.msk [vmem:[%s219] sm:$0xf] %vm199, %v218
        %v221 = vadd.f32 %v191, %v192
        %v222 = vmul.f32 %v221, 0.125
        %s223 = scalar_lea.vmem %s152, %s171 [#allocation5]
        %224 = vst.msk [vmem:[%s223] sm:$0xf] %vm199, %v222
        %v225 = vsub.f32 %v191, %v192
        %v226 = vmul.f32 %v225, 0.125
        %s227 = scalar_lea.vmem %s152, %s174 [#allocation5]
        %228 = vst.msk [vmem:[%s227] sm:$0xf] %vm199, %v226
        %s229 = sand.u32 %s68, 1
        %s230 = scalar_lea.sflag [#allocation4], %s229
        %s231 = sand.u32 %s68, 1
        %s232 = smul.addr %s231, 32
        %s233 = scalar_lea.vmem [#allocation5], %s232
        // Predicated region
        $region29: #{tpu_custom_call.1} parent=23 // pred_check
          %p234 = pneg %p78
        $region30: #{tpu_custom_call.1} parent=23 // pred_check_branch
          %236 = sbr.rel (%p234) target = $region32
        $region31: #{tpu_custom_call.1} parent=23 // pred_region
          %s238 = ssub.s32 512, 512
          %239 = vsyncadd %s230, %s238
          %s240 = smul.addr %s23, 4
          %s241 = smul.addr %s22, 32
          %s242 = sadd.s32 %s240, %s241
          %s243 = smul.addr %s242, 16
          %s244 = scalar_lea.hbm %s1, %s243
          %s245 = sshll.u32 %s233, 4
          %s246 = int_to_ptr.vmem [resolvable:$true] %s245
          %251 = dma.vmem_to_hbm [thread:$0]  %s246, 512, %s244, %s230, 64, 64, 4
        $region32: #{tpu_custom_call.1} parent=23 // pred_fallthru
          _
      $region24: #{tpu_custom_call.1} parent=5 // pred_fallthru
        _
      %p252 = scmp.le.s32.totalorder 2, %s13
      // Predicated region
      $region33: #{tpu_custom_call.1} parent=5 // pred_check
        %p253 = pneg %p252
      $region34: #{tpu_custom_call.1} parent=5 // pred_check_branch
        %255 = sbr.rel (%p253) target = $region36
      $region35: #{tpu_custom_call.1} parent=5 // pred_region
        %s256 = ssub.s32 %s13, 2
        // Predicated region
        $region37: #{tpu_custom_call.1} parent=35 // pred_check
          %p257 = pneg %p84
        $region38: #{tpu_custom_call.1} parent=35 // pred_check_branch
          %259 = sbr.rel (%p257) target = $region40
        $region39: #{tpu_custom_call.1} parent=35 // pred_region
          %s260 = sand.u32 %s69, 1
          %s261 = scalar_lea.sflag [#allocation4], %s260
          %s262 = sand.u32 %s69, 1
          %s263 = smul.addr %s262, 32
          %s264 = scalar_lea.vmem [#allocation5], %s263
          %265 = dma.done %s261, 512
        $region40: #{tpu_custom_call.1} parent=35 // pred_fallthru
          _
      $region36: #{tpu_custom_call.1} parent=5 // pred_fallthru
        _
    $region6: #{tpu_custom_call.1} parent=1 // loop_footer
      %s17 = sadd.s32 1, %s13
    $region7: #{tpu_custom_call.1} parent=1 // loop_footer_branch
      %12 = sbr.rel target = $region3
    $region8: #{tpu_custom_call.1} parent=1 // loop_exit
      _
    %266 = vsyncpa [#allocation3], 1
    %s267 = scalar_lea.sflag [#allocation3], 1
    %268 = vsyncpa %s267, 1
    %269 = vsyncpa [#allocation4], 1
    %s270 = scalar_lea.sflag [#allocation4], 1
    %271 = vsyncpa %s270, 1

</llo_original>
